<compile_context>
chip_gen: v5e
topology: v5e:2x2
jax: 0.10.0
libtpu: 0.0.40
codegen_flags: <defaults>
</compile_context>

<pallas_src>
import functools

import jax
import jax.numpy as jnp
from jax.experimental import pallas as pl
from jax.experimental.pallas import tpu as pltpu

_OUT_LANES = 128  # lane-dense output block width (lane 0 = reward, lane 1 = value)


def _fused_heads_kernel(task_ref, state_ref, action_ref, next_state_ref,
                        w1_ref, w2_ref, aux_ref, out_ref, *,
                        d_task, d_state, d_action, hidden):
    """Fused reward+value MLP heads; one batch tile per grid step.

    task/state/action/next_state refs : (bm, d_*)  bf16 activations
    w1_ref  : (D_all, 2H) bf16  block-structured first layer, rows grouped as
              [task | state | action | next_state], lanes [reward-H | value-H]
              (zero blocks keep the two heads from mixing).
    w2_ref  : (2H, 128) f32     col0 = [wr2; 0], col1 = [0; wv2], rest zeros.
    aux_ref : (2, max(2H,128)) f32  row0[:2H] = [br1 | bv1], row1[:2] = [br2, bv2].
    out_ref : (bm, 128) f32     lane 0 = reward, lane 1 = value, rest zeros.
    """
    h2 = 2 * hidden
    o_s = d_task
    o_a = d_task + d_state
    o_n = d_task + d_state + d_action

    # First layer of BOTH heads: four accumulating MXU dots against static
    # sublane row-slices of the resident weight slab (replaces the wrapper-side
    # activation concat -> no extra HBM pass).  f32 accumulation on the MXU.
    h = jnp.dot(task_ref[...], w1_ref[0:o_s, :],
                preferred_element_type=jnp.float32)
    h += jnp.dot(state_ref[...], w1_ref[o_s:o_a, :],
                 preferred_element_type=jnp.float32)
    h += jnp.dot(action_ref[...], w1_ref[o_a:o_n, :],
                 preferred_element_type=jnp.float32)
    h += jnp.dot(next_state_ref[...], w1_ref[o_n:o_n + d_state, :],
                 preferred_element_type=jnp.float32)
    h = jnp.maximum(h + aux_ref[0:1, 0:h2], 0.0)

    # hidden -> (reward, value) folded onto the (idle) MXU via the zero-padded
    # (2H, 128) slab: output stays lane-dense (unmasked stores) and all the
    # previous VPU iota/where mask work and XLU lane reductions disappear.
    out = jnp.dot(h, w2_ref[...], preferred_element_type=jnp.float32)
    out_ref[...] = (out + aux_ref[1:2, 0:_OUT_LANES]).astype(out_ref.dtype)


def _pick_block_b(batch):
    """Batch-tile size.

    Fat tiles amortize the ~0.35 us/step pipeline overhead, but for B > 128 we
    guarantee >= 2 grid steps so v7x's two TensorCores both get work (the batch
    axis is marked "parallel").  Tiles are capped at 512 rows and rounded up to
    a sublane multiple of 8.
    """
    if batch <= 128:
        return batch                      # single step; splitting only adds overhead
    half = -(-batch // 2)                 # cdiv(batch, 2)
    block = min(512, half)
    return -(-block // 8) * 8


def value_and_reward_forward(task, state, action, next_state, packed):
    """Runs the fused reward/value heads in a single Pallas kernel.

    Returns (reward, value), each of shape (B, 1) float32.
    """
    hidden = packed["hidden"]
    w1_all = packed["w1_all"]     # (D_all, 2H) bf16, block-structured
    w2_pad = packed["w2_pad"]     # (2H, 128)   f32, zero-padded lane-dense
    aux = packed["aux"]           # (2, max(2H,128)) f32 biases

    B, d_task = task.shape
    d_state = state.shape[1]
    d_action = action.shape[1]
    d_all = d_task + 2 * d_state + d_action
    h2 = 2 * hidden

    # Matmul operands in bf16 (halves activation DMA bytes; a no-op when the
    # caller already hands us bf16 activations).  Biases / epilogue stay f32.
    task_b = task.astype(jnp.bfloat16)
    state_b = state.astype(jnp.bfloat16)
    action_b = action.astype(jnp.bfloat16)
    next_b = next_state.astype(jnp.bfloat16)

    block_b = _pick_block_b(B)
    grid = (pl.cdiv(B, block_b),)

    flops = 2 * B * d_all * h2 + 2 * B * h2 * _OUT_LANES + 4 * B * h2
    bytes_accessed = (2 * B * d_all                 # bf16 activations
                      + 2 * d_all * h2              # bf16 first-layer slab
                      + 4 * h2 * _OUT_LANES         # f32 second-layer slab
                      + 4 * 2 * aux.shape[1]        # f32 biases
                      + 4 * B * _OUT_LANES)         # f32 output slab

    kernel = functools.partial(
        _fused_heads_kernel,
        d_task=d_task, d_state=d_state, d_action=d_action, hidden=hidden)

    out = pl.pallas_call(
        kernel,
        out_shape=jax.ShapeDtypeStruct((B, _OUT_LANES), jnp.float32),
        grid=grid,
        in_specs=[
            pl.BlockSpec((block_b, d_task), lambda i: (i, 0)),
            pl.BlockSpec((block_b, d_state), lambda i: (i, 0)),
            pl.BlockSpec((block_b, d_action), lambda i: (i, 0)),
            pl.BlockSpec((block_b, d_state), lambda i: (i, 0)),
            # Weight/bias slabs: constant index_map -> fetched once, resident.
            pl.BlockSpec((d_all, h2), lambda i: (0, 0)),
            pl.BlockSpec((h2, _OUT_LANES), lambda i: (0, 0)),
            pl.BlockSpec(aux.shape, lambda i: (0, 0)),
        ],
        out_specs=pl.BlockSpec((block_b, _OUT_LANES), lambda i: (i, 0)),
        compiler_params=pltpu.CompilerParams(
            dimension_semantics=("parallel",),
            vmem_limit_bytes=32 * 1024 * 1024),   # explicit budget (v7x: 64 MiB phys)
        cost_estimate=pl.CostEstimate(
            flops=flops, transcendentals=0, bytes_accessed=bytes_accessed),
    )(task_b, state_b, action_b, next_b, w1_all, w2_pad, aux)

    # Lane-dense (B, 128) slab -> reward / value columns.
    reward = out[:, 0:1]
    value = out[:, 1:2]
    return reward, value


def init_params(d_task, d_state, d_action, hidden):
    """Deterministic synthetic per-head parameters (no checkpoint load)."""
    keys = jax.random.split(jax.random.PRNGKey(42), 11)

    def w(key, shape):
        fan_in = shape[0]
        return (jax.random.normal(key, shape, jnp.float32) /
                jnp.sqrt(jnp.float32(fan_in)))

    return {
        # reward head: Linear(d_task+d_state+d_action -> hidden), ReLU, Linear(hidden -> 1)
        "wr_t": w(keys[0], (d_task, hidden)),
        "wr_s": w(keys[1], (d_state, hidden)),
        "wr_a": w(keys[2], (d_action, hidden)),
        "br1": 0.05 * jax.random.normal(keys[3], (1, hidden), jnp.float32),
        "wr2": w(keys[4], (hidden, 1)),
        "br2": 0.05 * jax.random.normal(keys[5], (1, 1), jnp.float32),
        # value head: Linear(d_task+d_state -> hidden), ReLU, Linear(hidden -> 1)
        "wv_t": w(keys[6], (d_task, hidden)),
        "wv_s": w(keys[7], (d_state, hidden)),
        "bv1": 0.05 * jax.random.normal(keys[8], (1, hidden), jnp.float32),
        "wv2": w(keys[9], (hidden, 1)),
        "bv2": 0.05 * jax.random.normal(keys[10], (1, 1), jnp.float32),
    }


def pack_params(p, hidden):
    """Packs per-head parameters into the 3 slabs the kernel consumes.

    w1_all (D_all, 2H, bf16) is block-structured so that
      [task ; state ; action ; next_state] rows @ w1_all
        = [ [task;state;action] @ W1_reward  |  [task;next_state] @ W1_value ]
    (task rows are shared between heads; zero blocks keep heads separate).
    w2_pad (2H, 128, f32) folds both hidden->1 projections into one lane-dense
    MXU operand.  aux (2, max(2H,128), f32) carries the first-layer biases and
    the two scalar output biases in a single resident DMA.
    """
    H = hidden
    d_state = p["wr_s"].shape[0]
    d_action = p["wr_a"].shape[0]
    z_s = jnp.zeros((d_state, H), jnp.float32)
    z_a = jnp.zeros((d_action, H), jnp.float32)

    w1_all = jnp.concatenate(
        [
            jnp.concatenate([p["wr_t"], p["wv_t"]], axis=1),   # task rows (shared)
            jnp.concatenate([p["wr_s"], z_s], axis=1),         # state rows (reward only)
            jnp.concatenate([p["wr_a"], z_a], axis=1),         # action rows (reward only)
            jnp.concatenate([z_s, p["wv_s"]], axis=1),         # next_state rows (value only)
        ],
        axis=0,
    ).astype(jnp.bfloat16)

    w2_pad = jnp.zeros((2 * H, _OUT_LANES), jnp.float32)
    w2_pad = w2_pad.at[0:H, 0].set(p["wr2"][:, 0])
    w2_pad = w2_pad.at[H:2 * H, 1].set(p["wv2"][:, 0])

    width = max(2 * H, _OUT_LANES)
    aux = jnp.zeros((2, width), jnp.float32)
    aux = aux.at[0, 0:2 * H].set(
        jnp.concatenate([p["br1"], p["bv1"]], axis=1)[0])
    aux = aux.at[1, 0].set(p["br2"][0, 0])
    aux = aux.at[1, 1].set(p["bv2"][0, 0])

    return {"w1_all": w1_all, "w2_pad": w2_pad, "aux": aux, "hidden": hidden}


def _reference_forward(task, state, action, next_state, p):
    """Pure-JAX reference.  First-layer operands are rounded to bf16 exactly
    like the kernel path (f32 accumulation); the second layer stays f32."""
    f32 = jnp.float32

    def bf(x):
        return x.astype(jnp.bfloat16).astype(f32)

    w1_r = bf(jnp.concatenate([p["wr_t"], p["wr_s"], p["wr_a"]], axis=0))
    x_r = bf(jnp.concatenate([task, state, action], axis=-1))
    rh = jnp.maximum(x_r @ w1_r + p["br1"], 0.0)
    reward = rh @ p["wr2"] + p["br2"]

    w1_v = bf(jnp.concatenate([p["wv_t"], p["wv_s"]], axis=0))
    x_v = bf(jnp.concatenate([task, next_state], axis=-1))
    vh = jnp.maximum(x_v @ w1_v + p["bv1"], 0.0)
    value = vh @ p["wv2"] + p["bv2"]
    return reward, value


if __name__ == "__main__":
    B, D_TASK, D_STATE, D_ACTION, HIDDEN = 8, 32, 32, 16, 32

    key = jax.random.PRNGKey(0)
    k_task, k_state, k_action, k_next = jax.random.split(key, 4)
    # Activations arrive in bf16 (the matmul-operand dtype the kernel consumes).
    task = jax.random.normal(k_task, (B, D_TASK), jnp.float32).astype(jnp.bfloat16)
    state = jax.random.normal(k_state, (B, D_STATE), jnp.float32).astype(jnp.bfloat16)
    action = jax.random.normal(k_action, (B, D_ACTION), jnp.float32).astype(jnp.bfloat16)
    next_state = jax.random.normal(k_next, (B, D_STATE), jnp.float32).astype(jnp.bfloat16)

    raw_params = init_params(D_TASK, D_STATE, D_ACTION, HIDDEN)
    packed = pack_params(raw_params, HIDDEN)

    reward, value = value_and_reward_forward(task, state, action, next_state, packed)
    jax.block_until_ready((reward, value))

    ref_reward, ref_value = _reference_forward(task, state, action, next_state, raw_params)
    assert reward.shape == (B, 1) and value.shape == (B, 1)
    assert jnp.allclose(reward, ref_reward, atol=1e-3, rtol=1e-3), (
        float(jnp.max(jnp.abs(reward - ref_reward))))
    assert jnp.allclose(value, ref_value, atol=1e-3, rtol=1e-3), (
        float(jnp.max(jnp.abs(value - ref_value))))

    print("KERNEL_OK")
</pallas_src>

<mosaic_0001>
module attributes {stable_mosaic.version = 11 : i64} {
  func.func @_fused_heads_kernel(%arg0: i32, %arg1: memref<8x32xbf16, #tpu.memory_space<vmem>>, %arg2: memref<8x32xbf16, #tpu.memory_space<vmem>>, %arg3: memref<8x16xbf16, #tpu.memory_space<vmem>>, %arg4: memref<8x32xbf16, #tpu.memory_space<vmem>>, %arg5: memref<112x64xbf16, #tpu.memory_space<vmem>>, %arg6: memref<64x128xf32, #tpu.memory_space<vmem>>, %arg7: memref<2x128xf32, #tpu.memory_space<vmem>>, %arg8: memref<8x128xf32, #tpu.memory_space<vmem>>) attributes {dimension_semantics = [#tpu.dimension_semantics<parallel>], iteration_bounds = array<i64: 1>, scalar_prefetch = 0 : i64, scratch_operands = 0 : i64, tpu.core_type = #tpu.core_type<tc>, window_params = [{transform_indices = @transform_0, window_bounds = array<i64: 8, 32>}, {transform_indices = @transform_1, window_bounds = array<i64: 8, 32>}, {transform_indices = @transform_2, window_bounds = array<i64: 8, 16>}, {transform_indices = @transform_3, window_bounds = array<i64: 8, 32>}, {pipeline_mode = #tpu.pipeline_mode<synchronous>, transform_indices = @transform_4, window_bounds = array<i64: 112, 64>}, {pipeline_mode = #tpu.pipeline_mode<synchronous>, transform_indices = @transform_5, window_bounds = array<i64: 64, 128>}, {pipeline_mode = #tpu.pipeline_mode<synchronous>, transform_indices = @transform_6, window_bounds = array<i64: 2, 128>}, {transform_indices = @transform_7, window_bounds = array<i64: 8, 128>}]} {
    %c0 = arith.constant 0 : index
    %c0_0 = arith.constant 0 : index
    %0 = vector.load %arg1[%c0, %c0_0] : memref<8x32xbf16, #tpu.memory_space<vmem>>, vector<8x32xbf16>
    %c0_1 = arith.constant 0 : index
    %c0_2 = arith.constant 0 : index
    %1 = vector.load %arg5[%c0_1, %c0_2] : memref<112x64xbf16, #tpu.memory_space<vmem>>, vector<32x64xbf16>
    %cst = arith.constant dense<0.000000e+00> : vector<8x64xf32>
    %2 = tpu.matmul %0, %1, %cst {dimension_numbers = #tpu.dot_dimension_numbers<[1], [0], [0], [1], [0, 0, 1, 1], [], []>} : vector<8x32xbf16>, vector<32x64xbf16>, vector<8x64xf32> -> vector<8x64xf32>
    %c0_3 = arith.constant 0 : index
    %c0_4 = arith.constant 0 : index
    %3 = vector.load %arg2[%c0_3, %c0_4] : memref<8x32xbf16, #tpu.memory_space<vmem>>, vector<8x32xbf16>
    %c32 = arith.constant 32 : index
    %c0_5 = arith.constant 0 : index
    %4 = vector.load %arg5[%c32, %c0_5] : memref<112x64xbf16, #tpu.memory_space<vmem>>, vector<32x64xbf16>
    %cst_6 = arith.constant dense<0.000000e+00> : vector<8x64xf32>
    %5 = tpu.matmul %3, %4, %cst_6 {dimension_numbers = #tpu.dot_dimension_numbers<[1], [0], [0], [1], [0, 0, 1, 1], [], []>} : vector<8x32xbf16>, vector<32x64xbf16>, vector<8x64xf32> -> vector<8x64xf32>
    %6 = arith.addf %2, %5 : vector<8x64xf32>
    %c0_7 = arith.constant 0 : index
    %c0_8 = arith.constant 0 : index
    %7 = vector.load %arg3[%c0_7, %c0_8] : memref<8x16xbf16, #tpu.memory_space<vmem>>, vector<8x16xbf16>
    %c64 = arith.constant 64 : index
    %c0_9 = arith.constant 0 : index
    %8 = vector.load %arg5[%c64, %c0_9] : memref<112x64xbf16, #tpu.memory_space<vmem>>, vector<16x64xbf16>
    %cst_10 = arith.constant dense<0.000000e+00> : vector<8x64xf32>
    %9 = tpu.matmul %7, %8, %cst_10 {dimension_numbers = #tpu.dot_dimension_numbers<[1], [0], [0], [1], [0, 0, 1, 1], [], []>} : vector<8x16xbf16>, vector<16x64xbf16>, vector<8x64xf32> -> vector<8x64xf32>
    %10 = arith.addf %6, %9 : vector<8x64xf32>
    %c0_11 = arith.constant 0 : index
    %c0_12 = arith.constant 0 : index
    %11 = vector.load %arg4[%c0_11, %c0_12] : memref<8x32xbf16, #tpu.memory_space<vmem>>, vector<8x32xbf16>
    %c80 = arith.constant 80 : index
    %c0_13 = arith.constant 0 : index
    %12 = vector.load %arg5[%c80, %c0_13] : memref<112x64xbf16, #tpu.memory_space<vmem>>, vector<32x64xbf16>
    %cst_14 = arith.constant dense<0.000000e+00> : vector<8x64xf32>
    %13 = tpu.matmul %11, %12, %cst_14 {dimension_numbers = #tpu.dot_dimension_numbers<[1], [0], [0], [1], [0, 0, 1, 1], [], []>} : vector<8x32xbf16>, vector<32x64xbf16>, vector<8x64xf32> -> vector<8x64xf32>
    %14 = arith.addf %10, %13 : vector<8x64xf32>
    %c0_15 = arith.constant 0 : index
    %c0_16 = arith.constant 0 : index
    %15 = vector.load %arg7[%c0_15, %c0_16] : memref<2x128xf32, #tpu.memory_space<vmem>>, vector<1x64xf32>
    %16 = vector.broadcast %15 : vector<1x64xf32> to vector<8x64xf32>
    %17 = arith.addf %14, %16 : vector<8x64xf32>
    %cst_17 = arith.constant 0.000000e+00 : f32
    %18 = vector.broadcast %cst_17 : f32 to vector<8x64xf32>
    %19 = arith.maximumf %17, %18 : vector<8x64xf32>
    %c0_18 = arith.constant 0 : index
    %c0_19 = arith.constant 0 : index
    %20 = vector.load %arg6[%c0_18, %c0_19] : memref<64x128xf32, #tpu.memory_space<vmem>>, vector<64x128xf32>
    %cst_20 = arith.constant dense<0.000000e+00> : vector<8x128xf32>
    %21 = tpu.matmul %19, %20, %cst_20 {dimension_numbers = #tpu.dot_dimension_numbers<[1], [0], [0], [1], [0, 0, 1, 1], [], []>} : vector<8x64xf32>, vector<64x128xf32>, vector<8x128xf32> -> vector<8x128xf32>
    %c1 = arith.constant 1 : index
    %c0_21 = arith.constant 0 : index
    %22 = vector.load %arg7[%c1, %c0_21] : memref<2x128xf32, #tpu.memory_space<vmem>>, vector<1x128xf32>
    %23 = vector.broadcast %22 : vector<1x128xf32> to vector<8x128xf32>
    %24 = arith.addf %21, %23 : vector<8x128xf32>
    %c0_22 = arith.constant 0 : index
    %c0_23 = arith.constant 0 : index
    %25 = vector.load %arg8[%c0_22, %c0_23] : memref<8x128xf32, #tpu.memory_space<vmem>>, vector<8x128xf32>
    tpu.vector_store %arg8[%c0_22, %c0_23], %24 {strides = array<i32>} : memref<8x128xf32, #tpu.memory_space<vmem>>, vector<8x128xf32>,
    return
  }
  func.func @transform_0(%arg0: i32) -> (i32, i32) {
    %c0_i32 = arith.constant 0 : i32
    %c0_i32_0 = arith.constant 0 : i32
    return %arg0, %c0_i32 : i32, i32
  }
  func.func @transform_1(%arg0: i32) -> (i32, i32) {
    %c0_i32 = arith.constant 0 : i32
    %c0_i32_0 = arith.constant 0 : i32
    return %arg0, %c0_i32 : i32, i32
  }
  func.func @transform_2(%arg0: i32) -> (i32, i32) {
    %c0_i32 = arith.constant 0 : i32
    %c0_i32_0 = arith.constant 0 : i32
    return %arg0, %c0_i32 : i32, i32
  }
  func.func @transform_3(%arg0: i32) -> (i32, i32) {
    %c0_i32 = arith.constant 0 : i32
    %c0_i32_0 = arith.constant 0 : i32
    return %arg0, %c0_i32 : i32, i32
  }
  func.func @transform_4(%arg0: i32) -> (i32, i32) {
    %c0_i32 = arith.constant 0 : i32
    %c0_i32_0 = arith.constant 0 : i32
    %c0_i32_1 = arith.constant 0 : i32
    return %c0_i32, %c0_i32_0 : i32, i32
  }
  func.func @transform_5(%arg0: i32) -> (i32, i32) {
    %c0_i32 = arith.constant 0 : i32
    %c0_i32_0 = arith.constant 0 : i32
    %c0_i32_1 = arith.constant 0 : i32
    return %c0_i32, %c0_i32_0 : i32, i32
  }
  func.func @transform_6(%arg0: i32) -> (i32, i32) {
    %c0_i32 = arith.constant 0 : i32
    %c0_i32_0 = arith.constant 0 : i32
    %c0_i32_1 = arith.constant 0 : i32
    return %c0_i32, %c0_i32_0 : i32, i32
  }
  func.func @transform_7(%arg0: i32) -> (i32, i32) {
    %c0_i32 = arith.constant 0 : i32
    %c0_i32_0 = arith.constant 0 : i32
    return %arg0, %c0_i32 : i32, i32
  }
}

</mosaic_0001>

<llo_original>
// kernel: tpu_custom_call.1
$region0: #{tpu_custom_call.1}
  #allocation0 [shape = 'u32[]', space=smem, size = 0x4, offset = 0x4, fixed_abs, tag = 'smem constant byte address 0x4 - core index']
  #allocation1 [shape = 'u32[72,128]{1,0:T(1,128)}', space=vmem, size = 0x9000, scoped, tag = 'internal scratch']
  %s0 = inlined_call_operand.vmem [shape: bf16[8,32], index: 0, kind: input, shape index: {}]
  %s1 = inlined_call_operand.vmem [shape: bf16[8,32], index: 1, kind: input, shape index: {}]
  %s2 = inlined_call_operand.vmem [shape: bf16[8,16], index: 2, kind: input, shape index: {}]
  %s3 = inlined_call_operand.vmem [shape: bf16[8,32], index: 3, kind: input, shape index: {}]
  %s4 = inlined_call_operand.vmem [shape: bf16[112,64], index: 4, kind: input, shape index: {}]
  %s5 = inlined_call_operand.vmem [shape: f32[64,128], index: 5, kind: input, shape index: {}]
  %s6 = inlined_call_operand.vmem [shape: f32[2,128], index: 6, kind: input, shape index: {}]
  %s7 = inlined_call_operand.hbm [shape: f32[8,128], index: 7, kind: output, shape index: {}]
  %s8 = sld [smem:[#allocation0]]
  $region38: #{tpu_custom_call.1} parent=0
    _
  %s10 = ssub.s32 1, %s8
  %s11 = scalar_select 0, %s10, %s8
  $region1: #{tpu_custom_call.1} parent=0
    #allocation2 [shape = 'u8[4096]{0}', space=vmem, size = 0x1000, scoped, tag = 'output window, operand 0, single buffered']
    #allocation3 [shape = 's32[1]{0}', space=sflag, size = 0x4, scoped, tag = 'scoped memory for tpu_custom_call.1']
    %12 = vsyncpa [#allocation3], 0
    // Predicated region
    $region2: #{tpu_custom_call.1} parent=1 // pred_check
      _
    $region3: #{tpu_custom_call.1} parent=1 // pred_check_branch
      %14 = sbr.rel (0) target = $region5
    $region4: #{tpu_custom_call.1} parent=1 // pred_region
      _
    $region5: #{tpu_custom_call.1} parent=1 // pred_fallthru
      _
    // Predicated region
    $region6: #{tpu_custom_call.1} parent=1 // pred_check
      _
    $region7: #{tpu_custom_call.1} parent=1 // pred_check_branch
      %16 = sbr.rel (0) target = $region9
    $region8: #{tpu_custom_call.1} parent=1 // pred_region
      _
    $region9: #{tpu_custom_call.1} parent=1 // pred_fallthru
      _
    // Predicated region
    $region10: #{tpu_custom_call.1} parent=1 // pred_check
      _
    $region11: #{tpu_custom_call.1} parent=1 // pred_check_branch
      %18 = sbr.rel (0) target = $region13
    $region12: #{tpu_custom_call.1} parent=1 // pred_region
      _
    $region13: #{tpu_custom_call.1} parent=1 // pred_fallthru
      _
    // Predicated region
    $region14: #{tpu_custom_call.1} parent=1 // pred_check
      _
    $region15: #{tpu_custom_call.1} parent=1 // pred_check_branch
      %20 = sbr.rel (0) target = $region17
    $region16: #{tpu_custom_call.1} parent=1 // pred_region
      _
    $region17: #{tpu_custom_call.1} parent=1 // pred_fallthru
      _
    // Predicated region
    $region18: #{tpu_custom_call.1} parent=1 // pred_check
      _
    $region19: #{tpu_custom_call.1} parent=1 // pred_check_branch
      %22 = sbr.rel (0) target = $region21
    $region20: #{tpu_custom_call.1} parent=1 // pred_region
      _
    $region21: #{tpu_custom_call.1} parent=1 // pred_fallthru
      _
    // Predicated region
    $region22: #{tpu_custom_call.1} parent=1 // pred_check
      _
    $region23: #{tpu_custom_call.1} parent=1 // pred_check_branch
      %24 = sbr.rel (0) target = $region25
    $region24: #{tpu_custom_call.1} parent=1 // pred_region
      _
    $region25: #{tpu_custom_call.1} parent=1 // pred_fallthru
      _
    // Predicated region
    $region26: #{tpu_custom_call.1} parent=1 // pred_check
      _
    $region27: #{tpu_custom_call.1} parent=1 // pred_check_branch
      %26 = sbr.rel (0) target = $region29
    $region28: #{tpu_custom_call.1} parent=1 // pred_region
      _
    $region29: #{tpu_custom_call.1} parent=1 // pred_fallthru
      _
    %v28 = vld [vmem:[%s0] sm:$0xf]
    %v29 = vld [vmem:[%s4] sm:$0xf]
    %v30 = vld [vmem:[%s4 + $0x4] sm:$0xf]
    %v31 = vld [vmem:[%s4 + $0x8] sm:$0xf]
    %v32 = vld [vmem:[%s4 + $0xc] sm:$0xf]
    %v33 = vld [vmem:[%s1] sm:$0xf]
    %v34 = vld [vmem:[%s4 + $0x10] sm:$0xf]
    %v35 = vld [vmem:[%s4 + $0x14] sm:$0xf]
    %v36 = vld [vmem:[%s4 + $0x18] sm:$0xf]
    %v37 = vld [vmem:[%s4 + $0x1c] sm:$0xf]
    %v42 = vunpack.c.l.b16 %v34
    %v43 = vunpack.c.l.b16 %v35
    %v44 = vunpack.c.l.b16 %v36
    %v45 = vunpack.c.l.b16 %v37
    %v46 = vpack.c.b16 %v43, %v42
    %v47 = vpack.c.b16 %v45, %v44
    %vm50 = vcmask 261120
    %v52 = vsel %vm50, %v33, 0
    %54 = vmatpush.bf16.msra.mxu0 0
    %55 = vmatpush.bf16.msra.mxu0 0
    %56 = vmatpush.bf16.msra.mxu0 0
    %57 = vmatpush.bf16.msra.mxu0 0
    %58 = vmatpush.bf16.msra.mxu0 0
    %59 = vmatpush.bf16.msra.mxu0 0
    %60 = vmatpush.bf16.msra.mxu0 %v47
    %61 = vmatpush.bf16.msra.mxu0 %v46
    %62 = vmatmul.bf16.gmra.mxu0 %v52
    %v63 = vpop.f32.mrf.mxu0
    %v64 = vadd.f32 0.0, %v63
    %v65 = vpop.f32.mrf.mxu0
    %66 = vdwg.mxu0
    %v71 = vunpack.c.l.b16 %v29
    %v72 = vunpack.c.l.b16 %v30
    %v73 = vunpack.c.l.b16 %v31
    %v74 = vunpack.c.l.b16 %v32
    %v75 = vpack.c.b16 %v72, %v71
    %v76 = vpack.c.b16 %v74, %v73
    %v80 = vsel %vm50, %v28, 0
    %82 = vmatpush.bf16.msra.mxu0 0
    %83 = vmatpush.bf16.msra.mxu0 0
    %84 = vmatpush.bf16.msra.mxu0 0
    %85 = vmatpush.bf16.msra.mxu0 0
    %86 = vmatpush.bf16.msra.mxu0 0
    %87 = vmatpush.bf16.msra.mxu0 0
    %88 = vmatpush.bf16.msra.mxu0 %v76
    %89 = vmatpush.bf16.msra.mxu0 %v75
    %90 = vmatmul.bf16.gmra.mxu0 %v80
    %v91 = vpop.f32.mrf.mxu0
    %v92 = vadd.f32 %v64, %v91
    %v93 = vpop.f32.mrf.mxu0
    %94 = vdwg.mxu0
    %v95 = vld [vmem:[%s2] sm:$0xf]
    %v96 = vld [vmem:[%s4 + $0x20] sm:$0xf]
    %v97 = vld [vmem:[%s4 + $0x24] sm:$0xf]
    %v100 = vunpack.c.l.b16 %v96
    %v101 = vunpack.c.l.b16 %v97
    %v102 = vpack.c.b16 %v101, %v100
    %vm104 = vcmask 130048
    %v106 = vsel %vm104, %v95, 0
    %108 = vmatpush.bf16.msra.mxu0 0
    %109 = vmatpush.bf16.msra.mxu0 0
    %110 = vmatpush.bf16.msra.mxu0 0
    %111 = vmatpush.bf16.msra.mxu0 0
    %112 = vmatpush.bf16.msra.mxu0 0
    %113 = vmatpush.bf16.msra.mxu0 0
    %114 = vmatpush.bf16.msra.mxu0 0
    %115 = vmatpush.bf16.msra.mxu0 %v102
    %116 = vmatmul.bf16.gmra.mxu0 %v106
    %v117 = vpop.f32.mrf.mxu0
    %v118 = vadd.f32 0.0, %v117
    %v119 = vpop.f32.mrf.mxu0
    %120 = vdwg.mxu0
    %v121 = vadd.f32 %v92, %v118
    %v122 = vld [vmem:[%s3] sm:$0xf]
    %v123 = vld [vmem:[%s4 + $0x28] sm:$0xf]
    %v124 = vld [vmem:[%s4 + $0x2c] sm:$0xf]
    %v125 = vld [vmem:[%s4 + $0x30] sm:$0xf]
    %v126 = vld [vmem:[%s4 + $0x34] sm:$0xf]
    %v131 = vunpack.c.l.b16 %v123
    %v132 = vunpack.c.l.b16 %v124
    %v133 = vunpack.c.l.b16 %v125
    %v134 = vunpack.c.l.b16 %v126
    %v135 = vpack.c.b16 %v132, %v131
    %v136 = vpack.c.b16 %v134, %v133
    %v140 = vsel %vm50, %v122, 0
    %142 = vmatpush.bf16.msra.mxu0 0
    %143 = vmatpush.bf16.msra.mxu0 0
    %144 = vmatpush.bf16.msra.mxu0 0
    %145 = vmatpush.bf16.msra.mxu0 0
    %146 = vmatpush.bf16.msra.mxu0 0
    %147 = vmatpush.bf16.msra.mxu0 0
    %148 = vmatpush.bf16.msra.mxu0 %v136
    %149 = vmatpush.bf16.msra.mxu0 %v135
    %150 = vmatmul.bf16.gmra.mxu0 %v140
    %v151 = vpop.f32.mrf.mxu0
    %v152 = vadd.f32 0.0, %v151
    %v153 = vpop.f32.mrf.mxu0
    %154 = vdwg.mxu0
    %v155 = vadd.f32 %v121, %v152
    %v156 = vld [vmem:[%s6] sm:$0x1]
    %v157 = vperm.slane %v156, 0
    %v158 = vadd.f32 %v155, %v157
    %v159 = vmax.f32 %v158, 0.0
    %v160 = vld [vmem:[%s5] sm:$0xff]
    %v161 = vld [vmem:[%s5 + $0x8] sm:$0xff]
    %v162 = vld [vmem:[%s5 + $0x10] sm:$0xff]
    %v163 = vld [vmem:[%s5 + $0x18] sm:$0xff]
    %v164 = vld [vmem:[%s5 + $0x20] sm:$0xff]
    %v165 = vld [vmem:[%s5 + $0x28] sm:$0xff]
    %v166 = vld [vmem:[%s5 + $0x30] sm:$0xff]
    %v167 = vld [vmem:[%s5 + $0x38] sm:$0xff]
    %v168 = vld [vmem:[%s6 + $0x1] sm:$0x1]
    %v169 = vperm.slane %v168, 0
    %vm170 = vcmask 523264
    %v172 = vsel %vm170, %v159, 0
    %174 = vmatpush.msra.mxu0 0.0
    %175 = vmatpush.msra.mxu0 0.0
    %176 = vmatpush.msra.mxu0 0.0
    %177 = vmatpush.msra.mxu0 0.0
    %178 = vmatpush.msra.mxu0 0.0
    %179 = vmatpush.msra.mxu0 0.0
    %180 = vmatpush.msra.mxu0 0.0
    %181 = vmatpush.msra.mxu0 0.0
    %182 = vmatpush.msra.mxu0 %v167
    %183 = vmatpush.msra.mxu0 %v166
    %184 = vmatpush.msra.mxu0 %v165
    %185 = vmatpush.msra.mxu0 %v164
    %186 = vmatpush.msra.mxu0 %v163
    %187 = vmatpush.msra.mxu0 %v162
    %188 = vmatpush.msra.mxu0 %v161
    %189 = vmatpush.msra.mxu0 %v160
    %190 = vmatmul.f32.gmra.mxu0 %v172
    %v191 = vpop.f32.mrf.mxu0
    %v192 = vadd.f32 %v169, %v191
    %193 = vdwg.mxu0
    %194 = vst [vmem:[#allocation2] sm:$0xff] %v192
    // Predicated region
    $region30: #{tpu_custom_call.1} parent=1 // pred_check
      _
    $region31: #{tpu_custom_call.1} parent=1 // pred_check_branch
      %196 = sbr.rel (0) target = $region33
    $region32: #{tpu_custom_call.1} parent=1 // pred_region
      %198 = vsyncadd [#allocation3], 0
      %s200 = sshll.u32 [#allocation2], 4
      %s201 = int_to_ptr.vmem [resolvable:$true] %s200
      %s202 = sshll.u32 %s7, 4
      %s203 = int_to_ptr.hbm [resolvable:$true] %s202
      %205 = dma.vmem_to_hbm [thread:$0]  %s201, 128, %s203, [#allocation3]
    $region33: #{tpu_custom_call.1} parent=1 // pred_fallthru
      _
    // Predicated region
    $region34: #{tpu_custom_call.1} parent=1 // pred_check
      _
    $region35: #{tpu_custom_call.1} parent=1 // pred_check_branch
      %207 = sbr.rel (0) target = $region37
    $region36: #{tpu_custom_call.1} parent=1 // pred_region
      %209 = dma.done [#allocation3], 128
    $region37: #{tpu_custom_call.1} parent=1 // pred_fallthru
      _
    %210 = vsyncpa [#allocation3], 1

</llo_original>
